<compile_context>
chip_gen: v6e
topology: v6e:2x2x1
jax: 0.10.0
libtpu: 0.0.40
codegen_flags: <defaults>
</compile_context>

<pallas_src>
import functools

import jax
import jax.numpy as jnp
import numpy as np
from jax import lax
from jax.experimental import pallas as pl
from jax.experimental.pallas import tpu as pltpu

CIN, COUT, K = 3, 2, 3
NEG_SLOPE = 0.33
LANES = 128


def conv_lrelu_kernel(x_ref, w_ref, b_ref, o_ref, *, img_w):
    # x_ref : VMEM (CIN, HWp) f32 — one image, spatial flattened as h*img_w + w on lanes.
    # w_ref : VMEM (COUT, K*K, CIN, 1) f32 — per-(co, tap) weight columns for lane-broadcast.
    # b_ref : SMEM (COUT,) f32.
    # o_ref : VMEM (COUT, HWp) f32 — valid conv output lives at lane j = ho*img_w + wo.
    _, hwp = x_ref.shape
    x = x_ref[...]  # whole (tiny) per-image tile

    # 9 window shifts, once, shared across both output channels (XLU lane rolls).
    # taps[kh*K+kw][ci, j] == x[ci, j + kh*img_w + kw] for every valid output lane j
    # (valid lanes never read the roll wrap-around / lane-pad region: max read index
    #  is H*W - 1 < HWp).
    taps = []
    for kh in range(K):
        for kw in range(K):
            d = kh * img_w + kw
            taps.append(x if d == 0 else pltpu.roll(x, hwp - d, axis=1))

    rows = []
    for co in range(COUT):
        # One partial accumulator per kernel row -> 3 short independent MAC chains per co.
        parts = []
        for kh in range(K):
            base = kh * K
            p = taps[base] * w_ref[co, base]            # (CIN,HWp) * (CIN,1) lane-broadcast
            for kw in range(1, K):
                p = p + taps[base + kw] * w_ref[co, base + kw]
            parts.append(p)
        acc = parts[0] + parts[1] + parts[2]            # (CIN, HWp)
        # Single cross-sublane reduce over input channels, then bias + LeakyReLU.
        y = jnp.sum(acc, axis=0, keepdims=True) + b_ref[co]
        rows.append(jnp.where(y >= 0.0, y, y * NEG_SLOPE))

    # Single full-block store of this image's (COUT, HWp) output slab.
    o_ref[...] = jnp.concatenate(rows, axis=0)


def mynet_fuse(x, w, b):
    """x: (N, 3, H, W); w: (2, 3, 3, 3) OIHW (PyTorch layout); b: (2,)."""
    N, cin, H, W = x.shape
    assert cin == CIN
    Ho, Wo = H - K + 1, W - K + 1
    HW = H * W
    HWp = ((HW + LANES - 1) // LANES) * LANES  # lane-dense padded flat spatial width

    # Free reshape (no transpose): (N, CIN, H, W) -> (N, CIN, HW); pad lanes if needed.
    x_k = x.astype(jnp.float32).reshape(N, CIN, HW)
    if HWp != HW:
        x_k = jnp.pad(x_k, ((0, 0), (0, 0), (0, HWp - HW)))

    # Tiny (54-float) weight relayout: OIHW -> (COUT, K*K, CIN, 1) broadcast columns.
    w_cols = jnp.transpose(w.astype(jnp.float32).reshape(COUT, CIN, K * K),
                           (0, 2, 1))[..., None]

    kernel = functools.partial(conv_lrelu_kernel, img_w=W)
    out_full = pl.pallas_call(
        kernel,
        out_shape=jax.ShapeDtypeStruct((N, COUT, HWp), jnp.float32),
        grid=(N,),
        in_specs=[
            pl.BlockSpec((None, CIN, HWp), lambda n: (n, 0, 0)),      # one image / step
            pl.BlockSpec(memory_space=pltpu.MemorySpace.VMEM),        # weight columns
            pl.BlockSpec(memory_space=pltpu.MemorySpace.SMEM),        # bias scalars
        ],
        out_specs=pl.BlockSpec((None, COUT, HWp), lambda n: (n, 0, 0)),
        compiler_params=pltpu.CompilerParams(dimension_semantics=("parallel",)),
    )(x_k, w_cols, b.astype(jnp.float32))

    # Only the valid conv window of the lane-dense slab is meaningful; slice it out.
    # (Lanes with wo >= Wo / ho >= Ho and the lane pad hold garbage by construction.)
    out = out_full[:, :, :HW].reshape(N, COUT, H, W)[:, :, :Ho, :Wo]
    return out


def reference(x, w, b):
    y = lax.conv_general_dilated(
        x, w, window_strides=(1, 1), padding="VALID",
        dimension_numbers=("NCHW", "OIHW", "NCHW"))
    y = y + b[None, :, None, None]
    return jnp.where(y >= 0, y, y * NEG_SLOPE)


if __name__ == "__main__":
    key = jax.random.PRNGKey(0)
    kx, kw, kb = jax.random.split(key, 3)

    # small shapes consistent with the module: batch=2, in_channels=3, spatial=16
    N, H, W = 2, 16, 16
    x = jax.random.normal(kx, (N, CIN, H, W), dtype=jnp.float32)

    # deterministic parameter init (PyTorch-style uniform bound = 1/sqrt(fan_in))
    bound = 1.0 / np.sqrt(CIN * K * K)
    w = jax.random.uniform(kw, (COUT, CIN, K, K), jnp.float32, -bound, bound)
    b = jax.random.uniform(kb, (COUT,), jnp.float32, -bound, bound)

    out = mynet_fuse(x, w, b)
    out = jax.block_until_ready(out)

    ref = jax.block_until_ready(reference(x, w, b))
    assert out.shape == (N, COUT, H - K + 1, W - K + 1), out.shape
    assert np.allclose(np.asarray(out), np.asarray(ref), atol=1e-5, rtol=1e-5)

    print("KERNEL_OK")
</pallas_src>

<mosaic_0001>
module attributes {stable_mosaic.version = 11 : i64} {
  func.func @conv_lrelu_kernel(%arg0: i32, %arg1: memref<1x3x256xf32, #tpu.memory_space<vmem>>, %arg2: memref<2x9x3x1xf32, #tpu.memory_space<vmem>>, %arg3: memref<2xf32, #tpu.memory_space<smem>>, %arg4: memref<1x2x256xf32, #tpu.memory_space<vmem>>) attributes {dimension_semantics = [#tpu.dimension_semantics<parallel>], iteration_bounds = array<i64: 2>, scalar_prefetch = 0 : i64, scratch_operands = 0 : i64, tpu.core_type = #tpu.core_type<tc>, window_params = [{transform_indices = @transform_0, window_bounds = array<i64: 1, 3, 256>}, {pipeline_mode = #tpu.pipeline_mode<synchronous>, transform_indices = @transform_1, window_bounds = array<i64: 2, 9, 3, 1>}, {transform_indices = @transform_2, window_bounds = array<i64: 2>}, {transform_indices = @transform_3, window_bounds = array<i64: 1, 2, 256>}]} {
    %c0 = arith.constant 0 : index
    %c0_0 = arith.constant 0 : index
    %c0_1 = arith.constant 0 : index
    %0 = vector.load %arg1[%c0, %c0_0, %c0_1] : memref<1x3x256xf32, #tpu.memory_space<vmem>>, vector<1x3x256xf32>
    %1 = vector.shape_cast %0 : vector<1x3x256xf32> to vector<3x256xf32>
    %c255_i32 = arith.constant 255 : i32
    %2 = tpu.dynamic_rotate %1 by %c255_i32 dim 1 : vector<3x256xf32>, i32 -> vector<3x256xf32>
    %c254_i32 = arith.constant 254 : i32
    %3 = tpu.dynamic_rotate %1 by %c254_i32 dim 1 : vector<3x256xf32>, i32 -> vector<3x256xf32>
    %c240_i32 = arith.constant 240 : i32
    %4 = tpu.dynamic_rotate %1 by %c240_i32 dim 1 : vector<3x256xf32>, i32 -> vector<3x256xf32>
    %c239_i32 = arith.constant 239 : i32
    %5 = tpu.dynamic_rotate %1 by %c239_i32 dim 1 : vector<3x256xf32>, i32 -> vector<3x256xf32>
    %c238_i32 = arith.constant 238 : i32
    %6 = tpu.dynamic_rotate %1 by %c238_i32 dim 1 : vector<3x256xf32>, i32 -> vector<3x256xf32>
    %c224_i32 = arith.constant 224 : i32
    %7 = tpu.dynamic_rotate %1 by %c224_i32 dim 1 : vector<3x256xf32>, i32 -> vector<3x256xf32>
    %c223_i32 = arith.constant 223 : i32
    %8 = tpu.dynamic_rotate %1 by %c223_i32 dim 1 : vector<3x256xf32>, i32 -> vector<3x256xf32>
    %c222_i32 = arith.constant 222 : i32
    %9 = tpu.dynamic_rotate %1 by %c222_i32 dim 1 : vector<3x256xf32>, i32 -> vector<3x256xf32>
    %c0_2 = arith.constant 0 : index
    %c0_3 = arith.constant 0 : index
    %c0_4 = arith.constant 0 : index
    %c0_5 = arith.constant 0 : index
    %10 = vector.load %arg2[%c0_2, %c0_3, %c0_4, %c0_5] : memref<2x9x3x1xf32, #tpu.memory_space<vmem>>, vector<1x1x3x1xf32>
    %11 = vector.shape_cast %10 : vector<1x1x3x1xf32> to vector<3x1xf32>
    %12 = vector.broadcast %11 : vector<3x1xf32> to vector<3x256xf32>
    %13 = arith.mulf %1, %12 : vector<3x256xf32>
    %c0_6 = arith.constant 0 : index
    %c1 = arith.constant 1 : index
    %c0_7 = arith.constant 0 : index
    %c0_8 = arith.constant 0 : index
    %14 = vector.load %arg2[%c0_6, %c1, %c0_7, %c0_8] : memref<2x9x3x1xf32, #tpu.memory_space<vmem>>, vector<1x1x3x1xf32>
    %15 = vector.shape_cast %14 : vector<1x1x3x1xf32> to vector<3x1xf32>
    %16 = vector.broadcast %15 : vector<3x1xf32> to vector<3x256xf32>
    %17 = arith.mulf %2, %16 : vector<3x256xf32>
    %18 = arith.addf %13, %17 : vector<3x256xf32>
    %c0_9 = arith.constant 0 : index
    %c2 = arith.constant 2 : index
    %c0_10 = arith.constant 0 : index
    %c0_11 = arith.constant 0 : index
    %19 = vector.load %arg2[%c0_9, %c2, %c0_10, %c0_11] : memref<2x9x3x1xf32, #tpu.memory_space<vmem>>, vector<1x1x3x1xf32>
    %20 = vector.shape_cast %19 : vector<1x1x3x1xf32> to vector<3x1xf32>
    %21 = vector.broadcast %20 : vector<3x1xf32> to vector<3x256xf32>
    %22 = arith.mulf %3, %21 : vector<3x256xf32>
    %23 = arith.addf %18, %22 : vector<3x256xf32>
    %c0_12 = arith.constant 0 : index
    %c3 = arith.constant 3 : index
    %c0_13 = arith.constant 0 : index
    %c0_14 = arith.constant 0 : index
    %24 = vector.load %arg2[%c0_12, %c3, %c0_13, %c0_14] : memref<2x9x3x1xf32, #tpu.memory_space<vmem>>, vector<1x1x3x1xf32>
    %25 = vector.shape_cast %24 : vector<1x1x3x1xf32> to vector<3x1xf32>
    %26 = vector.broadcast %25 : vector<3x1xf32> to vector<3x256xf32>
    %27 = arith.mulf %4, %26 : vector<3x256xf32>
    %c0_15 = arith.constant 0 : index
    %c4 = arith.constant 4 : index
    %c0_16 = arith.constant 0 : index
    %c0_17 = arith.constant 0 : index
    %28 = vector.load %arg2[%c0_15, %c4, %c0_16, %c0_17] : memref<2x9x3x1xf32, #tpu.memory_space<vmem>>, vector<1x1x3x1xf32>
    %29 = vector.shape_cast %28 : vector<1x1x3x1xf32> to vector<3x1xf32>
    %30 = vector.broadcast %29 : vector<3x1xf32> to vector<3x256xf32>
    %31 = arith.mulf %5, %30 : vector<3x256xf32>
    %32 = arith.addf %27, %31 : vector<3x256xf32>
    %c0_18 = arith.constant 0 : index
    %c5 = arith.constant 5 : index
    %c0_19 = arith.constant 0 : index
    %c0_20 = arith.constant 0 : index
    %33 = vector.load %arg2[%c0_18, %c5, %c0_19, %c0_20] : memref<2x9x3x1xf32, #tpu.memory_space<vmem>>, vector<1x1x3x1xf32>
    %34 = vector.shape_cast %33 : vector<1x1x3x1xf32> to vector<3x1xf32>
    %35 = vector.broadcast %34 : vector<3x1xf32> to vector<3x256xf32>
    %36 = arith.mulf %6, %35 : vector<3x256xf32>
    %37 = arith.addf %32, %36 : vector<3x256xf32>
    %c0_21 = arith.constant 0 : index
    %c6 = arith.constant 6 : index
    %c0_22 = arith.constant 0 : index
    %c0_23 = arith.constant 0 : index
    %38 = vector.load %arg2[%c0_21, %c6, %c0_22, %c0_23] : memref<2x9x3x1xf32, #tpu.memory_space<vmem>>, vector<1x1x3x1xf32>
    %39 = vector.shape_cast %38 : vector<1x1x3x1xf32> to vector<3x1xf32>
    %40 = vector.broadcast %39 : vector<3x1xf32> to vector<3x256xf32>
    %41 = arith.mulf %7, %40 : vector<3x256xf32>
    %c0_24 = arith.constant 0 : index
    %c7 = arith.constant 7 : index
    %c0_25 = arith.constant 0 : index
    %c0_26 = arith.constant 0 : index
    %42 = vector.load %arg2[%c0_24, %c7, %c0_25, %c0_26] : memref<2x9x3x1xf32, #tpu.memory_space<vmem>>, vector<1x1x3x1xf32>
    %43 = vector.shape_cast %42 : vector<1x1x3x1xf32> to vector<3x1xf32>
    %44 = vector.broadcast %43 : vector<3x1xf32> to vector<3x256xf32>
    %45 = arith.mulf %8, %44 : vector<3x256xf32>
    %46 = arith.addf %41, %45 : vector<3x256xf32>
    %c0_27 = arith.constant 0 : index
    %c8 = arith.constant 8 : index
    %c0_28 = arith.constant 0 : index
    %c0_29 = arith.constant 0 : index
    %47 = vector.load %arg2[%c0_27, %c8, %c0_28, %c0_29] : memref<2x9x3x1xf32, #tpu.memory_space<vmem>>, vector<1x1x3x1xf32>
    %48 = vector.shape_cast %47 : vector<1x1x3x1xf32> to vector<3x1xf32>
    %49 = vector.broadcast %48 : vector<3x1xf32> to vector<3x256xf32>
    %50 = arith.mulf %9, %49 : vector<3x256xf32>
    %51 = arith.addf %46, %50 : vector<3x256xf32>
    %52 = arith.addf %23, %37 : vector<3x256xf32>
    %53 = arith.addf %52, %51 : vector<3x256xf32>
    %cst = arith.constant dense<0.000000e+00> : vector<256xf32>
    %54 = vector.multi_reduction <add>, %53, %cst [0] : vector<3x256xf32> to vector<256xf32>
    %55 = vector.shape_cast %54 : vector<256xf32> to vector<1x256xf32>
    %c0_30 = arith.constant 0 : index
    %56 = memref.load %arg3[%c0_30] : memref<2xf32, #tpu.memory_space<smem>>
    %57 = vector.broadcast %56 : f32 to vector<1x256xf32>
    %58 = arith.addf %55, %57 : vector<1x256xf32>
    %cst_31 = arith.constant 0.000000e+00 : f32
    %59 = vector.broadcast %cst_31 : f32 to vector<1x256xf32>
    %60 = arith.cmpf oge, %58, %59 : vector<1x256xf32>
    %cst_32 = arith.constant 3.300000e-01 : f32
    %61 = vector.broadcast %cst_32 : f32 to vector<1x256xf32>
    %62 = arith.mulf %58, %61 : vector<1x256xf32>
    %63 = arith.select %60, %58, %62 : vector<1x256xi1>, vector<1x256xf32>
    %c1_33 = arith.constant 1 : index
    %c0_34 = arith.constant 0 : index
    %c0_35 = arith.constant 0 : index
    %c0_36 = arith.constant 0 : index
    %64 = vector.load %arg2[%c1_33, %c0_34, %c0_35, %c0_36] : memref<2x9x3x1xf32, #tpu.memory_space<vmem>>, vector<1x1x3x1xf32>
    %65 = vector.shape_cast %64 : vector<1x1x3x1xf32> to vector<3x1xf32>
    %66 = vector.broadcast %65 : vector<3x1xf32> to vector<3x256xf32>
    %67 = arith.mulf %1, %66 : vector<3x256xf32>
    %c1_37 = arith.constant 1 : index
    %c1_38 = arith.constant 1 : index
    %c0_39 = arith.constant 0 : index
    %c0_40 = arith.constant 0 : index
    %68 = vector.load %arg2[%c1_37, %c1_38, %c0_39, %c0_40] : memref<2x9x3x1xf32, #tpu.memory_space<vmem>>, vector<1x1x3x1xf32>
    %69 = vector.shape_cast %68 : vector<1x1x3x1xf32> to vector<3x1xf32>
    %70 = vector.broadcast %69 : vector<3x1xf32> to vector<3x256xf32>
    %71 = arith.mulf %2, %70 : vector<3x256xf32>
    %72 = arith.addf %67, %71 : vector<3x256xf32>
    %c1_41 = arith.constant 1 : index
    %c2_42 = arith.constant 2 : index
    %c0_43 = arith.constant 0 : index
    %c0_44 = arith.constant 0 : index
    %73 = vector.load %arg2[%c1_41, %c2_42, %c0_43, %c0_44] : memref<2x9x3x1xf32, #tpu.memory_space<vmem>>, vector<1x1x3x1xf32>
    %74 = vector.shape_cast %73 : vector<1x1x3x1xf32> to vector<3x1xf32>
    %75 = vector.broadcast %74 : vector<3x1xf32> to vector<3x256xf32>
    %76 = arith.mulf %3, %75 : vector<3x256xf32>
    %77 = arith.addf %72, %76 : vector<3x256xf32>
    %c1_45 = arith.constant 1 : index
    %c3_46 = arith.constant 3 : index
    %c0_47 = arith.constant 0 : index
    %c0_48 = arith.constant 0 : index
    %78 = vector.load %arg2[%c1_45, %c3_46, %c0_47, %c0_48] : memref<2x9x3x1xf32, #tpu.memory_space<vmem>>, vector<1x1x3x1xf32>
    %79 = vector.shape_cast %78 : vector<1x1x3x1xf32> to vector<3x1xf32>
    %80 = vector.broadcast %79 : vector<3x1xf32> to vector<3x256xf32>
    %81 = arith.mulf %4, %80 : vector<3x256xf32>
    %c1_49 = arith.constant 1 : index
    %c4_50 = arith.constant 4 : index
    %c0_51 = arith.constant 0 : index
    %c0_52 = arith.constant 0 : index
    %82 = vector.load %arg2[%c1_49, %c4_50, %c0_51, %c0_52] : memref<2x9x3x1xf32, #tpu.memory_space<vmem>>, vector<1x1x3x1xf32>
    %83 = vector.shape_cast %82 : vector<1x1x3x1xf32> to vector<3x1xf32>
    %84 = vector.broadcast %83 : vector<3x1xf32> to vector<3x256xf32>
    %85 = arith.mulf %5, %84 : vector<3x256xf32>
    %86 = arith.addf %81, %85 : vector<3x256xf32>
    %c1_53 = arith.constant 1 : index
    %c5_54 = arith.constant 5 : index
    %c0_55 = arith.constant 0 : index
    %c0_56 = arith.constant 0 : index
    %87 = vector.load %arg2[%c1_53, %c5_54, %c0_55, %c0_56] : memref<2x9x3x1xf32, #tpu.memory_space<vmem>>, vector<1x1x3x1xf32>
    %88 = vector.shape_cast %87 : vector<1x1x3x1xf32> to vector<3x1xf32>
    %89 = vector.broadcast %88 : vector<3x1xf32> to vector<3x256xf32>
    %90 = arith.mulf %6, %89 : vector<3x256xf32>
    %91 = arith.addf %86, %90 : vector<3x256xf32>
    %c1_57 = arith.constant 1 : index
    %c6_58 = arith.constant 6 : index
    %c0_59 = arith.constant 0 : index
    %c0_60 = arith.constant 0 : index
    %92 = vector.load %arg2[%c1_57, %c6_58, %c0_59, %c0_60] : memref<2x9x3x1xf32, #tpu.memory_space<vmem>>, vector<1x1x3x1xf32>
    %93 = vector.shape_cast %92 : vector<1x1x3x1xf32> to vector<3x1xf32>
    %94 = vector.broadcast %93 : vector<3x1xf32> to vector<3x256xf32>
    %95 = arith.mulf %7, %94 : vector<3x256xf32>
    %c1_61 = arith.constant 1 : index
    %c7_62 = arith.constant 7 : index
    %c0_63 = arith.constant 0 : index
    %c0_64 = arith.constant 0 : index
    %96 = vector.load %arg2[%c1_61, %c7_62, %c0_63, %c0_64] : memref<2x9x3x1xf32, #tpu.memory_space<vmem>>, vector<1x1x3x1xf32>
    %97 = vector.shape_cast %96 : vector<1x1x3x1xf32> to vector<3x1xf32>
    %98 = vector.broadcast %97 : vector<3x1xf32> to vector<3x256xf32>
    %99 = arith.mulf %8, %98 : vector<3x256xf32>
    %100 = arith.addf %95, %99 : vector<3x256xf32>
    %c1_65 = arith.constant 1 : index
    %c8_66 = arith.constant 8 : index
    %c0_67 = arith.constant 0 : index
    %c0_68 = arith.constant 0 : index
    %101 = vector.load %arg2[%c1_65, %c8_66, %c0_67, %c0_68] : memref<2x9x3x1xf32, #tpu.memory_space<vmem>>, vector<1x1x3x1xf32>
    %102 = vector.shape_cast %101 : vector<1x1x3x1xf32> to vector<3x1xf32>
    %103 = vector.broadcast %102 : vector<3x1xf32> to vector<3x256xf32>
    %104 = arith.mulf %9, %103 : vector<3x256xf32>
    %105 = arith.addf %100, %104 : vector<3x256xf32>
    %106 = arith.addf %77, %91 : vector<3x256xf32>
    %107 = arith.addf %106, %105 : vector<3x256xf32>
    %cst_69 = arith.constant dense<0.000000e+00> : vector<256xf32>
    %108 = vector.multi_reduction <add>, %107, %cst_69 [0] : vector<3x256xf32> to vector<256xf32>
    %109 = vector.shape_cast %108 : vector<256xf32> to vector<1x256xf32>
    %c1_70 = arith.constant 1 : index
    %110 = memref.load %arg3[%c1_70] : memref<2xf32, #tpu.memory_space<smem>>
    %111 = vector.broadcast %110 : f32 to vector<1x256xf32>
    %112 = arith.addf %109, %111 : vector<1x256xf32>
    %cst_71 = arith.constant 0.000000e+00 : f32
    %113 = vector.broadcast %cst_71 : f32 to vector<1x256xf32>
    %114 = arith.cmpf oge, %112, %113 : vector<1x256xf32>
    %cst_72 = arith.constant 3.300000e-01 : f32
    %115 = vector.broadcast %cst_72 : f32 to vector<1x256xf32>
    %116 = arith.mulf %112, %115 : vector<1x256xf32>
    %117 = arith.select %114, %112, %116 : vector<1x256xi1>, vector<1x256xf32>
    %118 = tpu.concatenate %63, %117 in 0 : vector<1x256xf32>, vector<1x256xf32> -> vector<2x256xf32>
    %c0_73 = arith.constant 0 : index
    %c0_74 = arith.constant 0 : index
    %c0_75 = arith.constant 0 : index
    %119 = vector.load %arg4[%c0_73, %c0_74, %c0_75] : memref<1x2x256xf32, #tpu.memory_space<vmem>>, vector<1x2x256xf32>
    %120 = vector.shape_cast %119 : vector<1x2x256xf32> to vector<2x256xf32>
    %121 = vector.shape_cast %118 : vector<2x256xf32> to vector<1x2x256xf32>
    tpu.vector_store %arg4[%c0_73, %c0_74, %c0_75], %121 {strides = array<i32>} : memref<1x2x256xf32, #tpu.memory_space<vmem>>, vector<1x2x256xf32>,
    return
  }
  func.func @transform_0(%arg0: i32) -> (i32, i32, i32) {
    %c0_i32 = arith.constant 0 : i32
    %c0_i32_0 = arith.constant 0 : i32
    %c0_i32_1 = arith.constant 0 : i32
    return %arg0, %c0_i32, %c0_i32_0 : i32, i32, i32
  }
  func.func @transform_1(%arg0: i32) -> (i32, i32, i32, i32) {
    %c0_i32 = arith.constant 0 : i32
    %c0_i32_0 = arith.constant 0 : i32
    %c0_i32_1 = arith.constant 0 : i32
    %c0_i32_2 = arith.constant 0 : i32
    %c0_i32_3 = arith.constant 0 : i32
    return %c0_i32, %c0_i32_0, %c0_i32_1, %c0_i32_2 : i32, i32, i32, i32
  }
  func.func @transform_2(%arg0: i32) -> i32 {
    %c0_i32 = arith.constant 0 : i32
    %c0_i32_0 = arith.constant 0 : i32
    return %c0_i32 : i32
  }
  func.func @transform_3(%arg0: i32) -> (i32, i32, i32) {
    %c0_i32 = arith.constant 0 : i32
    %c0_i32_0 = arith.constant 0 : i32
    %c0_i32_1 = arith.constant 0 : i32
    return %arg0, %c0_i32, %c0_i32_0 : i32, i32, i32
  }
}

</mosaic_0001>

<llo_original>
// kernel: tpu_custom_call.1
$region0: #{tpu_custom_call.1}
  #allocation0 [shape = 'u32[]', space=smem, size = 0x4, offset = 0x4, fixed_abs, tag = 'smem constant byte address 0x4 - core index']
  #allocation1 [shape = 'u32[144,128]{1,0:T(1,128)}', space=vmem, size = 0x12000, scoped, tag = 'internal scratch']
  %s0 = inlined_call_operand.vmem [shape: f32[2,3,256], index: 0, kind: input, shape index: {}]
  %s1 = inlined_call_operand.vmem [shape: f32[2,9,3,1], index: 1, kind: input, shape index: {}]
  %s2 = inlined_call_operand.vmem [shape: f32[2], index: 2, kind: input, shape index: {}]
  %s3 = inlined_call_operand.hbm [shape: f32[2,2,256], index: 3, kind: output, shape index: {}]
  %s4 = sld [smem:[#allocation0]]
  $region49: #{tpu_custom_call.1} parent=0
    _
  %s6 = ssub.s32 1, %s4
  %s7 = scalar_select 0, %s6, %s4
  $region1: #{tpu_custom_call.1} parent=0
    #allocation2 [shape = 'u8[512]{0}', space=smem, size = 0x200, scoped, tag = 'input window, operand 2, single buffered']
    #allocation3 [shape = 's32[2]{0}', space=sflag, size = 0x8, scoped, tag = 'scoped memory for tpu_custom_call.1']
    #allocation4 [shape = 's32[2]{0}', space=sflag, size = 0x8, scoped, tag = 'scoped memory for tpu_custom_call.1']
    #allocation5 [shape = 'u8[4096]{0}', space=vmem, size = 0x1000, scoped, tag = 'output window, operand 0']
    %8 = vsyncpa [#allocation4], 0
    %9 = vsyncpa [#allocation3], 0
    %s10 = scalar_lea.sflag [#allocation3], 1
    %11 = vsyncpa %s10, 0
    loop: start=0, step=1, limit=4
    $region2: #{tpu_custom_call.1} parent=1 // loop_pre_header
      _
    $region3: #{tpu_custom_call.1} parent=1 // loop_header
      %s13 = sphi 0, %s17
      %p14 = scmp.ge.s32.totalorder %s13, 4
      %s23 = sphi 0, %s25
      %s26 = sphi 0, %s23
      %s27 = sphi 0, %s26
      %s43 = sphi 0, %s27
      %s47 = sphi 0, %s47
      %s49 = sphi 0, %s47
      %s50 = sphi 0, %s49
      %s64 = sphi 0, %s50
      %s68 = sphi 0, %s68
      %s70 = sphi 0, %s68
      %s71 = sphi 0, %s70
      %s85 = sphi 0, %s71
      %s91 = sphi 0, %s93
      %s94 = sphi 0, %s91
      %s95 = sphi 0, %s94
      %s111 = sphi 0, %s95
    $region4: #{tpu_custom_call.1} parent=1 // loop_header_branch
      %16 = sbr.rel (%p14) target = $region8
    $region5: #{tpu_custom_call.1} parent=1 // loop_body
      %s18 = ssub.s32 %s13, 1
      %s19 = ssub.s32 %s13, 2
      %s20 = sadd.s32 %s13, 1
      %s21 = ssub.s32 %s13, %s20
      %p22 = scmp.eq.s32.totalorder %s21, 0
      %s24 = sadd.s32 %s23, 1
      %s25 = scalar_select %p22, %s23, %s24
      %p28 = pneg %p22
      %p29 = scmp.eq.s32.totalorder %s13, 1
      %p30 = por %p28, %p29
      %p31 = scmp.ne.s32.totalorder %s23, %s26
      %p32 = scmp.eq.s32.totalorder %s13, 0
      %p33 = por %p31, %p32
      %p34 = scmp.ne.s32.totalorder %s23, %s26
      %p35 = scmp.eq.s32.totalorder %s18, 1
      %p36 = por %p34, %p35
      %p37 = scmp.ne.s32.totalorder %s26, %s27
      %p38 = scmp.eq.s32.totalorder %s18, 0
      %p39 = por %p37, %p38
      %p40 = scmp.ne.s32.totalorder %s26, %s27
      %p41 = scmp.eq.s32.totalorder %s19, 1
      %p42 = por %p40, %p41
      %p44 = scmp.ne.s32.totalorder %s27, %s43
      %p45 = scmp.eq.s32.totalorder %s19, 0
      %p46 = por %p44, %p45
      %s48 = sadd.s32 %s47, 1
      %p51 = scmp.eq.s32.totalorder %s13, 1
      %p52 = scmp.ne.s32.totalorder %s47, %s49
      %p53 = scmp.eq.s32.totalorder %s13, 0
      %p54 = por %p52, %p53
      %p55 = scmp.ne.s32.totalorder %s47, %s49
      %p56 = scmp.eq.s32.totalorder %s18, 1
      %p57 = por %p55, %p56
      %p58 = scmp.ne.s32.totalorder %s49, %s50
      %p59 = scmp.eq.s32.totalorder %s18, 0
      %p60 = por %p58, %p59
      %p61 = scmp.ne.s32.totalorder %s49, %s50
      %p62 = scmp.eq.s32.totalorder %s19, 1
      %p63 = por %p61, %p62
      %p65 = scmp.ne.s32.totalorder %s50, %s64
      %p66 = scmp.eq.s32.totalorder %s19, 0
      %p67 = por %p65, %p66
      %s69 = sadd.s32 %s68, 1
      %p72 = scmp.eq.s32.totalorder %s13, 1
      %p73 = scmp.ne.s32.totalorder %s68, %s70
      %p74 = scmp.eq.s32.totalorder %s13, 0
      %p75 = por %p73, %p74
      %p76 = scmp.ne.s32.totalorder %s68, %s70
      %p77 = scmp.eq.s32.totalorder %s18, 1
      %p78 = por %p76, %p77
      %p79 = scmp.ne.s32.totalorder %s70, %s71
      %p80 = scmp.eq.s32.totalorder %s18, 0
      %p81 = por %p79, %p80
      %p82 = scmp.ne.s32.totalorder %s70, %s71
      %p83 = scmp.eq.s32.totalorder %s19, 1
      %p84 = por %p82, %p83
      %p86 = scmp.ne.s32.totalorder %s71, %s85
      %p87 = scmp.eq.s32.totalorder %s19, 0
      %p88 = por %p86, %p87
      %s89 = ssub.s32 %s13, %s20
      %p90 = scmp.eq.s32.totalorder %s89, 0
      %s92 = sadd.s32 %s91, 1
      %s93 = scalar_select %p90, %s91, %s92
      %p96 = pneg %p90
      %p97 = scmp.eq.s32.totalorder %s13, 1
      %p98 = por %p96, %p97
      %p99 = scmp.ne.s32.totalorder %s91, %s94
      %p100 = scmp.eq.s32.totalorder %s13, 0
      %p101 = por %p99, %p100
      %p102 = scmp.ne.s32.totalorder %s91, %s94
      %p103 = scmp.eq.s32.totalorder %s18, 1
      %p104 = por %p102, %p103
      %p105 = scmp.ne.s32.totalorder %s94, %s95
      %p106 = scmp.eq.s32.totalorder %s18, 0
      %p107 = por %p105, %p106
      %p108 = scmp.ne.s32.totalorder %s94, %s95
      %p109 = scmp.eq.s32.totalorder %s19, 1
      %p110 = por %p108, %p109
      %p112 = scmp.ne.s32.totalorder %s95, %s111
      %p113 = scmp.eq.s32.totalorder %s19, 0
      %p114 = por %p112, %p113
      %p115 = scmp.le.s32.totalorder 1, %s13
      %p116 = scmp.lt.s32.totalorder %s13, 3
      %p117 = pnand %p115, %p116
      %p118 = pneg %p117
      // Predicated region
      $region9: #{tpu_custom_call.1} parent=5 // pred_check
        _
      $region10: #{tpu_custom_call.1} parent=5 // pred_check_branch
        %120 = sbr.rel (%p117) target = $region12
      $region11: #{tpu_custom_call.1} parent=5 // pred_region
        %s121 = ssub.s32 %s13, 1
        // Predicated region
        $region13: #{tpu_custom_call.1} parent=11 // pred_check
          %p122 = pneg %p60
        $region14: #{tpu_custom_call.1} parent=11 // pred_check_branch
          %124 = sbr.rel (%p122) target = $region16
        $region15: #{tpu_custom_call.1} parent=11 // pred_region
          _
        $region16: #{tpu_custom_call.1} parent=11 // pred_fallthru
          _
        // Predicated region
        $region17: #{tpu_custom_call.1} parent=11 // pred_check
          %p125 = pneg %p81
        $region18: #{tpu_custom_call.1} parent=11 // pred_check_branch
          %127 = sbr.rel (%p125) target = $region20
        $region19: #{tpu_custom_call.1} parent=11 // pred_region
          %s129 = ssub.s32 16, 16
          %130 = vsyncadd [#allocation4], %s129
          %s132 = sshll.u32 %s2, 4
          %s133 = int_to_ptr.vmem [resolvable:$true] %s132
          %135 = dma.vmem_to_smem %s133, 16, [#allocation2], [#allocation4]
        $region20: #{tpu_custom_call.1} parent=11 // pred_fallthru
          _
      $region12: #{tpu_custom_call.1} parent=5 // pred_fallthru
        _
      %p136 = scmp.lt.s32.totalorder %s13, 2
      // Predicated region
      $region21: #{tpu_custom_call.1} parent=5 // pred_check
        %p137 = pneg %p136
      $region22: #{tpu_custom_call.1} parent=5 // pred_check_branch
        %139 = sbr.rel (%p137) target = $region24
      $region23: #{tpu_custom_call.1} parent=5 // pred_region
        // Predicated region
        $region25: #{tpu_custom_call.1} parent=23 // pred_check
          %p140 = pneg %p33
        $region26: #{tpu_custom_call.1} parent=23 // pred_check_branch
          %142 = sbr.rel (%p140) target = $region28
        $region27: #{tpu_custom_call.1} parent=23 // pred_region
          %p143 = scmp.lt.s32.totalorder %s13, 1
          %s144 = scalar_select %p143, %s13, 1
          %s145 = smul.addr %s144, 2
          %s146 = smul.addr %s145, 4
          %s147 = scalar_lea.vmem %s0, %s146
        $region28: #{tpu_custom_call.1} parent=23 // pred_fallthru
          _
      $region24: #{tpu_custom_call.1} parent=5 // pred_fallthru
        _
      %p148 = scmp.le.s32.totalorder 1, %s13
      %p149 = scmp.lt.s32.totalorder %s13, 3
      %p150 = pnand %p148, %p149
      %p151 = pneg %p150
      // Predicated region
      $region29: #{tpu_custom_call.1} parent=5 // pred_check
        _
      $region30: #{tpu_custom_call.1} parent=5 // pred_check_branch
        %153 = sbr.rel (%p150) target = $region32
      $region31: #{tpu_custom_call.1} parent=5 // pred_region
        %s154 = ssub.s32 %s13, 1
        // Predicated region
        $region33: #{tpu_custom_call.1} parent=31 // pred_check
          %p155 = pneg %p81
        $region34: #{tpu_custom_call.1} parent=31 // pred_check_branch
          %157 = sbr.rel (%p155) target = $region36
        $region35: #{tpu_custom_call.1} parent=31 // pred_region
          %158 = dma.done [#allocation4], 16
        $region36: #{tpu_custom_call.1} parent=31 // pred_fallthru
          _
        %159 = sfence
        %p160 = scmp.lt.s32.totalorder %s18, 1
        %s161 = scalar_select %p160, %s18, 1
        %s162 = smul.addr %s161, 2
        %s163 = smul.addr %s162, 4
        %s164 = scalar_lea.vmem %s0, %s163
        %p165 = pneg %p39
        %p166 = pneg %p36
        %p167 = pneg %p60
        %p168 = pneg %p57
        %p169 = pneg %p81
        %p170 = pneg %p78
        %p171 = pneg %p107
        %p172 = pneg %p104
        %s173 = sand.u32 %s94, 1
        %s174 = scalar_lea.sflag [#allocation3], %s173
        %s175 = sand.u32 %s94, 1
        %s176 = smul.addr %s175, 4
        %s177 = scalar_lea.vmem [#allocation5], %s176
        %p178 = scmp.lt.s32.totalorder %s18, 1
        %s179 = scalar_select %p178, %s18, 1
        %s180 = smul.addr %s179, 2
        %s181 = smul.addr %s180, 4
        %s182 = scalar_lea.vmem %s0, %s181
        %v183 = vld [vmem:[%s182] sm:$0x77]
        %v185 = vcombine.high %v183, %v183
        %187 = vrot.lane.b32.xlu0 %v183, 127
        %v188 = vpop.permute.xlu0 %187
        %189 = vrot.lane.b32.xlu0 %v185, 127
        %v190 = vpop.permute.xlu0 %189
        %v191 = vlaneseq
        %v192 = vand.u32 %v191, 127
        %vm193 = vcmp.lt.s32.totalorder %v192, 127
        %v194 = vsel %vm193, %v188, %v190
        %v195 = vsel %vm193, %v190, %v188
        %196 = vrot.lane.b32.xlu0 %v183, 126
        %v197 = vpop.permute.xlu0 %196
        %198 = vrot.lane.b32.xlu0 %v185, 126
        %v199 = vpop.permute.xlu0 %198
        %vm200 = vcmp.lt.s32.totalorder %v192, 126
        %v201 = vsel %vm200, %v197, %v199
        %v202 = vsel %vm200, %v199, %v197
        %203 = vrot.lane.b32.xlu0 %v183, 112
        %v204 = vpop.permute.xlu0 %203
        %205 = vrot.lane.b32.xlu0 %v185, 112
        %v206 = vpop.permute.xlu0 %205
        %vm207 = vcmp.lt.s32.totalorder %v192, 112
        %v208 = vsel %vm207, %v204, %v206
        %v209 = vsel %vm207, %v206, %v204
        %210 = vrot.lane.b32.xlu0 %v183, 111
        %v211 = vpop.permute.xlu0 %210
        %212 = vrot.lane.b32.xlu0 %v185, 111
        %v213 = vpop.permute.xlu0 %212
        %vm214 = vcmp.lt.s32.totalorder %v192, 111
        %v215 = vsel %vm214, %v211, %v213
        %v216 = vsel %vm214, %v213, %v211
        %217 = vrot.lane.b32.xlu0 %v183, 110
        %v218 = vpop.permute.xlu0 %217
        %219 = vrot.lane.b32.xlu0 %v185, 110
        %v220 = vpop.permute.xlu0 %219
        %vm221 = vcmp.lt.s32.totalorder %v192, 110
        %v222 = vsel %vm221, %v218, %v220
        %v223 = vsel %vm221, %v220, %v218
        %224 = vrot.lane.b32.xlu0 %v183, 96
        %v225 = vpop.permute.xlu0 %224
        %226 = vrot.lane.b32.xlu0 %v185, 96
        %v227 = vpop.permute.xlu0 %226
        %vm228 = vcmp.lt.s32.totalorder %v192, 96
        %v229 = vsel %vm228, %v225, %v227
        %v230 = vsel %vm228, %v227, %v225
        %231 = vrot.lane.b32.xlu0 %v183, 95
        %v232 = vpop.permute.xlu0 %231
        %233 = vrot.lane.b32.xlu0 %v185, 95
        %v234 = vpop.permute.xlu0 %233
        %vm235 = vcmp.lt.s32.totalorder %v192, 95
        %v236 = vsel %vm235, %v232, %v234
        %v237 = vsel %vm235, %v234, %v232
        %238 = vrot.lane.b32.xlu0 %v183, 94
        %v239 = vpop.permute.xlu0 %238
        %240 = vrot.lane.b32.xlu0 %v185, 94
        %v241 = vpop.permute.xlu0 %240
        %vm242 = vcmp.lt.s32.totalorder %v192, 94
        %v243 = vsel %vm242, %v239, %v241
        %v244 = vsel %vm242, %v241, %v239
        %v245 = vld [vmem:[%s1] sm:$0x7]
        %247 = vset.pattern.permute.xlu0 0
        %248 = vperm.xlu0 %247, %v245
        %v249 = vpop.permute.xlu0 %248
        %v251 = vunpack.c.l.s4 839922192
        %v252 = vunpack.c.0.s8 %v251
        %v253 = vlaneseq
        %v254 = vshrl.u32 %v253, 7
        %v255 = vsub.s32 %v252, %v254
        %v256 = vrot.slane %v249, %v255
        %v258 = vmul.f32 %v183, %v256
        %s259 = scalar_lea.vmem %s1, 4
        %v260 = vld [vmem:[%s259] sm:$0x7]
        %262 = vset.pattern.permute.xlu0 0
        %263 = vperm.xlu0 %262, %v260
        %v264 = vpop.permute.xlu0 %263
        %v266 = vmul.f32 %v194, %v264
        %v267 = vmul.f32 %v195, %v264
        %v270 = vcombine.low %v266, %v267
        %v272 = vadd.f32 %v258, %v270
        %s273 = scalar_lea.vmem %s1, 8
        %v274 = vld [vmem:[%s273] sm:$0x7]
        %276 = vset.pattern.permute.xlu0 0
        %277 = vperm.xlu0 %276, %v274
        %v278 = vpop.permute.xlu0 %277
        %v280 = vmul.f32 %v201, %v278
        %v281 = vmul.f32 %v202, %v278
        %v284 = vcombine.low %v280, %v281
        %v286 = vadd.f32 %v272, %v284
        %s287 = scalar_lea.vmem %s1, 12
        %v288 = vld [vmem:[%s287] sm:$0x7]
        %290 = vset.pattern.permute.xlu0 0
        %291 = vperm.xlu0 %290, %v288
        %v292 = vpop.permute.xlu0 %291
        %v294 = vmul.f32 %v208, %v292
        %v295 = vmul.f32 %v209, %v292
        %s296 = scalar_lea.vmem %s1, 16
        %v297 = vld [vmem:[%s296] sm:$0x7]
        %299 = vset.pattern.permute.xlu0 0
        %300 = vperm.xlu0 %299, %v297
        %v301 = vpop.permute.xlu0 %300
        %v303 = vmul.f32 %v215, %v301
        %v304 = vmul.f32 %v216, %v301
        %v305 = vadd.f32 %v294, %v303
        %v306 = vadd.f32 %v295, %v304
        %s307 = scalar_lea.vmem %s1, 20
        %v308 = vld [vmem:[%s307] sm:$0x7]
        %310 = vset.pattern.permute.xlu0 0
        %311 = vperm.xlu0 %310, %v308
        %v312 = vpop.permute.xlu0 %311
        %v314 = vmul.f32 %v222, %v312
        %v315 = vmul.f32 %v223, %v312
        %v316 = vadd.f32 %v305, %v314
        %v317 = vadd.f32 %v306, %v315
        %s318 = scalar_lea.vmem %s1, 24
        %v319 = vld [vmem:[%s318] sm:$0x7]
        %321 = vset.pattern.permute.xlu0 0
        %322 = vperm.xlu0 %321, %v319
        %v323 = vpop.permute.xlu0 %322
        %v325 = vmul.f32 %v229, %v323
        %v326 = vmul.f32 %v230, %v323
        %s327 = scalar_lea.vmem %s1, 28
        %v328 = vld [vmem:[%s327] sm:$0x7]
        %330 = vset.pattern.permute.xlu0 0
        %331 = vperm.xlu0 %330, %v328
        %v332 = vpop.permute.xlu0 %331
        %v334 = vmul.f32 %v236, %v332
        %v335 = vmul.f32 %v237, %v332
        %v336 = vadd.f32 %v325, %v334
        %v337 = vadd.f32 %v326, %v335
        %s338 = scalar_lea.vmem %s1, 32
        %v339 = vld [vmem:[%s338] sm:$0x7]
        %341 = vset.pattern.permute.xlu0 0
        %342 = vperm.xlu0 %341, %v339
        %v343 = vpop.permute.xlu0 %342
        %v345 = vmul.f32 %v243, %v343
        %v346 = vmul.f32 %v244, %v343
        %v347 = vadd.f32 %v336, %v345
        %v348 = vadd.f32 %v337, %v346
        %v351 = vcombine.low %v316, %v317
        %v353 = vadd.f32 %v286, %v351
        %v356 = vcombine.low %v347, %v348
        %v358 = vadd.f32 %v353, %v356
        %v360 = vcombine.high %v358, %v358
        %vm362 = vcmask 1042432
        %v363 = vsel %vm362, %v358, 0.0
        %v364 = vrot.slane %v363, 4
        %v365 = vadd.f32 %v363, %v364
        %v366 = vrot.slane %v365, 2
        %v367 = vadd.f32 %v365, %v366
        %v368 = vrot.slane %v367, 1
        %v369 = vadd.f32 %v367, %v368
        %v370 = vsel %vm362, %v360, 0.0
        %v371 = vrot.slane %v370, 4
        %v372 = vadd.f32 %v370, %v371
        %v373 = vrot.slane %v372, 2
        %v374 = vadd.f32 %v372, %v373
        %v375 = vrot.slane %v374, 1
        %v376 = vadd.f32 %v374, %v375
        %s377 = sld [smem:[#allocation2]]
        %v378 = vstv %s377
        %v379 = vadd.f32 %v369, %v378
        %v380 = vadd.f32 %v376, %v378
        %vm381 = vcmp.ge.f32.partialorder %v379, 0.0
        %vm382 = vcmp.ge.f32.partialorder %v380, 0.0
        %v383 = vmul.f32 %v379, 0.33
        %v384 = vmul.f32 %v380, 0.33
        %v385 = vsel %vm381, %v379, %v383
        %v386 = vsel %vm382, %v380, %v384
        %s387 = scalar_lea.vmem %s1, 36
        %v388 = vld [vmem:[%s387] sm:$0x7]
        %390 = vset.pattern.permute.xlu0 0
        %391 = vperm.xlu0 %390, %v388
        %v392 = vpop.permute.xlu0 %391
        %v394 = vunpack.c.l.s4 839922192
        %v395 = vunpack.c.0.s8 %v394
        %v396 = vlaneseq
        %v397 = vshrl.u32 %v396, 7
        %v398 = vsub.s32 %v395, %v397
        %v399 = vrot.slane %v392, %v398
        %v401 = vmul.f32 %v183, %v399
        %s402 = scalar_lea.vmem %s1, 40
        %v403 = vld [vmem:[%s402] sm:$0x7]
        %405 = vset.pattern.permute.xlu0 0
        %406 = vperm.xlu0 %405, %v403
        %v407 = vpop.permute.xlu0 %406
        %v409 = vmul.f32 %v194, %v407
        %v410 = vmul.f32 %v195, %v407
        %v413 = vcombine.low %v409, %v410
        %v415 = vadd.f32 %v401, %v413
        %s416 = scalar_lea.vmem %s1, 44
        %v417 = vld [vmem:[%s416] sm:$0x7]
        %419 = vset.pattern.permute.xlu0 0
        %420 = vperm.xlu0 %419, %v417
        %v421 = vpop.permute.xlu0 %420
        %v423 = vmul.f32 %v201, %v421
        %v424 = vmul.f32 %v202, %v421
        %v427 = vcombine.low %v423, %v424
        %v429 = vadd.f32 %v415, %v427
        %s430 = scalar_lea.vmem %s1, 48
        %v431 = vld [vmem:[%s430] sm:$0x7]
        %433 = vset.pattern.permute.xlu0 0
        %434 = vperm.xlu0 %433, %v431
        %v435 = vpop.permute.xlu0 %434
        %v437 = vmul.f32 %v208, %v435
        %v438 = vmul.f32 %v209, %v435
        %s439 = scalar_lea.vmem %s1, 52
        %v440 = vld [vmem:[%s439] sm:$0x7]
        %442 = vset.pattern.permute.xlu0 0
        %443 = vperm.xlu0 %442, %v440
        %v444 = vpop.permute.xlu0 %443
        %v446 = vmul.f32 %v215, %v444
        %v447 = vmul.f32 %v216, %v444
        %v448 = vadd.f32 %v437, %v446
        %v449 = vadd.f32 %v438, %v447
        %s450 = scalar_lea.vmem %s1, 56
        %v451 = vld [vmem:[%s450] sm:$0x7]
        %453 = vset.pattern.permute.xlu0 0
        %454 = vperm.xlu0 %453, %v451
        %v455 = vpop.permute.xlu0 %454
        %v457 = vmul.f32 %v222, %v455
        %v458 = vmul.f32 %v223, %v455
        %v459 = vadd.f32 %v448, %v457
        %v460 = vadd.f32 %v449, %v458
        %s461 = scalar_lea.vmem %s1, 60
        %v462 = vld [vmem:[%s461] sm:$0x7]
        %464 = vset.pattern.permute.xlu0 0
        %465 = vperm.xlu0 %464, %v462
        %v466 = vpop.permute.xlu0 %465
        %v468 = vmul.f32 %v229, %v466
        %v469 = vmul.f32 %v230, %v466
        %s470 = scalar_lea.vmem %s1, 64
        %v471 = vld [vmem:[%s470] sm:$0x7]
        %473 = vset.pattern.permute.xlu0 0
        %474 = vperm.xlu0 %473, %v471
        %v475 = vpop.permute.xlu0 %474
        %v477 = vmul.f32 %v236, %v475
        %v478 = vmul.f32 %v237, %v475
        %v479 = vadd.f32 %v468, %v477
        %v480 = vadd.f32 %v469, %v478
        %s481 = scalar_lea.vmem %s1, 68
        %v482 = vld [vmem:[%s481] sm:$0x7]
        %484 = vset.pattern.permute.xlu0 0
        %485 = vperm.xlu0 %484, %v482
        %v486 = vpop.permute.xlu0 %485
        %v488 = vmul.f32 %v243, %v486
        %v489 = vmul.f32 %v244, %v486
        %v490 = vadd.f32 %v479, %v488
        %v491 = vadd.f32 %v480, %v489
        %v494 = vcombine.low %v459, %v460
        %v496 = vadd.f32 %v429, %v494
        %v499 = vcombine.low %v490, %v491
        %v501 = vadd.f32 %v496, %v499
        %v503 = vcombine.high %v501, %v501
        %v505 = vsel %vm362, %v501, 0.0
        %v506 = vrot.slane %v505, 4
        %v507 = vadd.f32 %v505, %v506
        %v508 = vrot.slane %v507, 2
        %v509 = vadd.f32 %v507, %v508
        %v510 = vrot.slane %v509, 1
        %v511 = vadd.f32 %v509, %v510
        %v512 = vsel %vm362, %v503, 0.0
        %v513 = vrot.slane %v512, 4
        %v514 = vadd.f32 %v512, %v513
        %v515 = vrot.slane %v514, 2
        %v516 = vadd.f32 %v514, %v515
        %v517 = vrot.slane %v516, 1
        %v518 = vadd.f32 %v516, %v517
        %s519 = sld [smem:[#allocation2 + $0x1]]
        %v520 = vstv %s519
        %v521 = vadd.f32 %v511, %v520
        %v522 = vadd.f32 %v518, %v520
        %vm523 = vcmp.ge.f32.partialorder %v521, 0.0
        %vm524 = vcmp.ge.f32.partialorder %v522, 0.0
        %v525 = vmul.f32 %v521, 0.33
        %v526 = vmul.f32 %v522, 0.33
        %v527 = vsel %vm523, %v521, %v525
        %v528 = vsel %vm524, %v522, %v526
        %vm529 = vcmask 1040384
        %v530 = vsel %vm529, %v385, %v527
        %v531 = vsel %vm529, %v386, %v528
        %v534 = vcombine.low %v530, %v531
        %v536 = vunpack.c.l.s4 1983009808
        %v537 = vunpack.c.0.s8 %v536
        %v538 = vlaneseq
        %v539 = vshrl.u32 %v538, 7
        %v540 = vsub.s32 %v537, %v539
        %v541 = vrot.slane %v534, %v540
        %543 = vst [vmem:[%s177] sm:$0xf] %v541
        %s544 = sand.u32 %s94, 1
        %s545 = scalar_lea.sflag [#allocation3], %s544
        %s546 = sand.u32 %s94, 1
        %s547 = smul.addr %s546, 4
        %s548 = scalar_lea.vmem [#allocation5], %s547
        // Predicated region
        $region37: #{tpu_custom_call.1} parent=31 // pred_check
          %p549 = pneg %p104
        $region38: #{tpu_custom_call.1} parent=31 // pred_check_branch
          %551 = sbr.rel (%p549) target = $region40
        $region39: #{tpu_custom_call.1} parent=31 // pred_region
          %s553 = ssub.s32 64, 64
          %554 = vsyncadd %s545, %s553
          %s555 = smul.addr %s18, 2
          %s556 = smul.addr %s555, 32
          %s557 = scalar_lea.hbm %s3, %s556
          %s559 = sshll.u32 %s548, 4
          %s560 = int_to_ptr.vmem [resolvable:$true] %s559
          %562 = dma.vmem_to_hbm [thread:$0]  %s560, 64, %s557, %s545
        $region40: #{tpu_custom_call.1} parent=31 // pred_fallthru
          _
      $region32: #{tpu_custom_call.1} parent=5 // pred_fallthru
        _
      %p563 = scmp.le.s32.totalorder 2, %s13
      // Predicated region
      $region41: #{tpu_custom_call.1} parent=5 // pred_check
        %p564 = pneg %p563
      $region42: #{tpu_custom_call.1} parent=5 // pred_check_branch
        %566 = sbr.rel (%p564) target = $region44
      $region43: #{tpu_custom_call.1} parent=5 // pred_region
        %s567 = ssub.s32 %s13, 2
        // Predicated region
        $region45: #{tpu_custom_call.1} parent=43 // pred_check
          %p568 = pneg %p110
        $region46: #{tpu_custom_call.1} parent=43 // pred_check_branch
          %570 = sbr.rel (%p568) target = $region48
        $region47: #{tpu_custom_call.1} parent=43 // pred_region
          %s571 = sand.u32 %s95, 1
          %s572 = scalar_lea.sflag [#allocation3], %s571
          %s573 = sand.u32 %s95, 1
          %s574 = smul.addr %s573, 4
          %s575 = scalar_lea.vmem [#allocation5], %s574
          %576 = dma.done %s572, 64
        $region48: #{tpu_custom_call.1} parent=43 // pred_fallthru
          _
      $region44: #{tpu_custom_call.1} parent=5 // pred_fallthru
        _
    $region6: #{tpu_custom_call.1} parent=1 // loop_footer
      %s17 = sadd.s32 1, %s13
    $region7: #{tpu_custom_call.1} parent=1 // loop_footer_branch
      %12 = sbr.rel target = $region3
    $region8: #{tpu_custom_call.1} parent=1 // loop_exit
      _
    %577 = vsyncpa [#allocation3], 1
    %s578 = scalar_lea.sflag [#allocation3], 1
    %579 = vsyncpa %s578, 1
    %580 = vsyncpa [#allocation4], 1
    %s581 = scalar_lea.sflag [#allocation4], 1
    %582 = vsyncpa %s581, 1

</llo_original>
